<compile_context>
chip_gen: v6e
topology: v6e:2x2x1
jax: 0.10.0
libtpu: 0.0.40
codegen_flags: <defaults>
</compile_context>

<pallas_src>
import jax
import jax.numpy as jnp
from jax.experimental import pallas as pl
from jax.experimental.pallas import tpu as pltpu


def _p2p_mlp_kernel(x_ref,
                    w0_ref, b0_ref,
                    w1_ref, b1_ref,
                    w2_ref, b2_ref,
                    w3_ref, b3_ref,
                    o_ref):
    """x_ref: (C_in, tile_n) bf16; w*: (C_out, C_in) bf16 (w3 as (C_in3, 1) f32);
    b*: (C_out, 1) f32.  All intermediates are (C_out, tile_n):
    channels on sublanes, points on lanes."""
    x = x_ref[...]                                                    # bf16
    # layer 0: (64, 131) @ (131, tn) -> f32 (64, tn)
    h = jnp.dot(w0_ref[...], x, preferred_element_type=jnp.float32)
    h = jnp.maximum(h + b0_ref[...], 0.0)                             # ReLU, f32
    # layer 1: (32, 64) @ (64, tn)
    h = jnp.dot(w1_ref[...], h.astype(jnp.bfloat16),
                preferred_element_type=jnp.float32)
    h = jnp.maximum(h + b1_ref[...], 0.0)
    # layer 2: (16, 32) @ (32, tn)
    h = jnp.dot(w2_ref[...], h.astype(jnp.bfloat16),
                preferred_element_type=jnp.float32)
    h = jnp.maximum(h + b2_ref[...], 0.0)
    # layer 3 (16 -> 1): VPU multiply + XLU sublane-reduce instead of a 1-row
    # MXU matmul.  ReLU on the last layer matches the PyTorch module.
    y = jnp.sum(h * w3_ref[...], axis=0, keepdims=True) + b3_ref[...]
    o_ref[...] = jnp.maximum(y, 0.0).astype(o_ref.dtype)


def p2p_regressor_forward(feats, params, *, tile_n=512):
    """feats: (B, C_in, N) (PyTorch NCL layout).  Returns (B, 1, N) float32."""
    (w0, b0), (w1, b1), (w2, b2), (w3, b3) = params
    B, C_in, N = feats.shape
    assert tile_n % 128 == 0, "tile_n must be a multiple of 128 (lane width)"

    # bf16 matmul operands; biases and elementwise math stay f32.
    x = feats.astype(jnp.bfloat16)
    w0b = w0.astype(jnp.bfloat16)
    w1b = w1.astype(jnp.bfloat16)
    w2b = w2.astype(jnp.bfloat16)
    w3c = jnp.transpose(w3).astype(jnp.float32)          # (16, 1) for VPU path

    # Pad the point axis up to a tile multiple (sliced off below).
    n_tiles = pl.cdiv(N, tile_n)
    n_pad = n_tiles * tile_n
    if n_pad != N:
        x = jnp.pad(x, ((0, 0), (0, 0), (0, n_pad - N)))

    point_blk = lambda b, n: (b, 0, n)      # tile over (batch, point) axes
    const_blk = lambda b, n: (0, 0)         # resident weights / biases

    out = pl.pallas_call(
        _p2p_mlp_kernel,
        out_shape=jax.ShapeDtypeStruct((B, 1, n_pad), jnp.float32),
        grid_spec=pltpu.PrefetchScalarGridSpec(
            num_scalar_prefetch=0,
            grid=(B, n_tiles),
            in_specs=[
                pl.BlockSpec((None, C_in, tile_n), point_blk),
                pl.BlockSpec(w0b.shape, const_blk),
                pl.BlockSpec(b0.shape, const_blk),
                pl.BlockSpec(w1b.shape, const_blk),
                pl.BlockSpec(b1.shape, const_blk),
                pl.BlockSpec(w2b.shape, const_blk),
                pl.BlockSpec(b2.shape, const_blk),
                pl.BlockSpec(w3c.shape, const_blk),
                pl.BlockSpec(b3.shape, const_blk),
            ],
            out_specs=pl.BlockSpec((None, 1, tile_n), point_blk),
        ),
        compiler_params=pltpu.CompilerParams(
            dimension_semantics=("parallel", "parallel")),
    )(x, w0b, b0, w1b, b1, w2b, b2, w3c, b3)

    return out[:, :, :N] if n_pad != N else out


def init_params(key, feat_dim, block_num):
    """Conv1d(k=1) layers as (C_out, C_in) matrices + (C_out, 1) biases."""
    input_dim = 3 + feat_dim * (block_num + 2)
    dims = [input_dim, feat_dim * 2, feat_dim, feat_dim // 2, 1]
    params = []
    for li in range(4):
        key, kw, kb = jax.random.split(key, 3)
        c_in, c_out = dims[li], dims[li + 1]
        w = jax.random.normal(kw, (c_out, c_in), jnp.float32) * 0.05
        b = jax.random.normal(kb, (c_out, 1), jnp.float32) * 0.05
        params.append((w, b))
    return params, input_dim


def _reference_forward(feats, params):
    """Pure-JAX reference mirroring the kernel's bf16-matmul / f32-elementwise."""
    (w0, b0), (w1, b1), (w2, b2), (w3, b3) = params
    h = feats.astype(jnp.bfloat16)
    for (w, b) in ((w0, b0), (w1, b1), (w2, b2)):
        a = jnp.einsum("oc,bcn->bon", w.astype(jnp.bfloat16),
                       h.astype(jnp.bfloat16),
                       preferred_element_type=jnp.float32)
        h = jnp.maximum(a + b[None], 0.0)                 # f32
    y = jnp.einsum("oc,bcn->bon", w3, h, preferred_element_type=jnp.float32)
    return jnp.maximum(y + b3[None], 0.0)


if __name__ == "__main__":
    feat_dim = 32
    block_num = 2
    B, N = 2, 2048            # grid = (2, 4): 8 independent steps at tile_n=512
    tile_n = 512

    key = jax.random.PRNGKey(0)
    params, input_dim = init_params(key, feat_dim, block_num)   # input_dim = 131

    kx = jax.random.fold_in(key, 1234)
    feats = jax.random.normal(kx, (B, input_dim, N), jnp.float32)

    out = p2p_regressor_forward(feats, params, tile_n=tile_n)
    out = jax.block_until_ready(out)

    ref = _reference_forward(feats, params)
    assert out.shape == (B, 1, N), out.shape
    assert jnp.allclose(out, ref, atol=2e-3, rtol=2e-3), (
        "max abs err = %e" % float(jnp.max(jnp.abs(out - ref))))

    print("KERNEL_OK")
</pallas_src>

<mosaic_0001>
module attributes {stable_mosaic.version = 11 : i64} {
  func.func @_p2p_mlp_kernel(%arg0: i32, %arg1: i32, %arg2: memref<1x131x512xbf16, #tpu.memory_space<vmem>>, %arg3: memref<64x131xbf16, #tpu.memory_space<vmem>>, %arg4: memref<64x1xf32, #tpu.memory_space<vmem>>, %arg5: memref<32x64xbf16, #tpu.memory_space<vmem>>, %arg6: memref<32x1xf32, #tpu.memory_space<vmem>>, %arg7: memref<16x32xbf16, #tpu.memory_space<vmem>>, %arg8: memref<16x1xf32, #tpu.memory_space<vmem>>, %arg9: memref<16x1xf32, #tpu.memory_space<vmem>>, %arg10: memref<1x1xf32, #tpu.memory_space<vmem>>, %arg11: memref<1x1x512xf32, #tpu.memory_space<vmem>>) attributes {dimension_semantics = [#tpu.dimension_semantics<parallel>, #tpu.dimension_semantics<parallel>], iteration_bounds = array<i64: 2, 4>, scalar_prefetch = 0 : i64, scratch_operands = 0 : i64, tpu.core_type = #tpu.core_type<tc>, window_params = [{transform_indices = @transform_0, window_bounds = array<i64: 1, 131, 512>}, {pipeline_mode = #tpu.pipeline_mode<synchronous>, transform_indices = @transform_1, window_bounds = array<i64: 64, 131>}, {pipeline_mode = #tpu.pipeline_mode<synchronous>, transform_indices = @transform_2, window_bounds = array<i64: 64, 1>}, {pipeline_mode = #tpu.pipeline_mode<synchronous>, transform_indices = @transform_3, window_bounds = array<i64: 32, 64>}, {pipeline_mode = #tpu.pipeline_mode<synchronous>, transform_indices = @transform_4, window_bounds = array<i64: 32, 1>}, {pipeline_mode = #tpu.pipeline_mode<synchronous>, transform_indices = @transform_5, window_bounds = array<i64: 16, 32>}, {pipeline_mode = #tpu.pipeline_mode<synchronous>, transform_indices = @transform_6, window_bounds = array<i64: 16, 1>}, {pipeline_mode = #tpu.pipeline_mode<synchronous>, transform_indices = @transform_7, window_bounds = array<i64: 16, 1>}, {pipeline_mode = #tpu.pipeline_mode<synchronous>, transform_indices = @transform_8, window_bounds = array<i64: 1, 1>}, {transform_indices = @transform_9, window_bounds = array<i64: 1, 1, 512>}]} {
    %c0 = arith.constant 0 : index
    %c0_0 = arith.constant 0 : index
    %c0_1 = arith.constant 0 : index
    %0 = vector.load %arg2[%c0, %c0_0, %c0_1] : memref<1x131x512xbf16, #tpu.memory_space<vmem>>, vector<1x131x512xbf16>
    %1 = vector.shape_cast %0 : vector<1x131x512xbf16> to vector<131x512xbf16>
    %c0_2 = arith.constant 0 : index
    %c0_3 = arith.constant 0 : index
    %2 = vector.load %arg3[%c0_2, %c0_3] : memref<64x131xbf16, #tpu.memory_space<vmem>>, vector<64x131xbf16>
    %cst = arith.constant dense<0.000000e+00> : vector<64x512xf32>
    %3 = tpu.matmul %2, %1, %cst {dimension_numbers = #tpu.dot_dimension_numbers<[1], [0], [0], [1], [0, 0, 1, 1], [], []>} : vector<64x131xbf16>, vector<131x512xbf16>, vector<64x512xf32> -> vector<64x512xf32>
    %c0_4 = arith.constant 0 : index
    %c0_5 = arith.constant 0 : index
    %4 = vector.load %arg4[%c0_4, %c0_5] : memref<64x1xf32, #tpu.memory_space<vmem>>, vector<64x1xf32>
    %5 = vector.broadcast %4 : vector<64x1xf32> to vector<64x512xf32>
    %6 = arith.addf %3, %5 : vector<64x512xf32>
    %cst_6 = arith.constant 0.000000e+00 : f32
    %7 = vector.broadcast %cst_6 : f32 to vector<64x512xf32>
    %8 = arith.maximumf %6, %7 : vector<64x512xf32>
    %c0_7 = arith.constant 0 : index
    %c0_8 = arith.constant 0 : index
    %9 = vector.load %arg5[%c0_7, %c0_8] : memref<32x64xbf16, #tpu.memory_space<vmem>>, vector<32x64xbf16>
    %10 = arith.truncf %8 : vector<64x512xf32> to vector<64x512xbf16>
    %cst_9 = arith.constant dense<0.000000e+00> : vector<32x512xf32>
    %11 = tpu.matmul %9, %10, %cst_9 {dimension_numbers = #tpu.dot_dimension_numbers<[1], [0], [0], [1], [0, 0, 1, 1], [], []>} : vector<32x64xbf16>, vector<64x512xbf16>, vector<32x512xf32> -> vector<32x512xf32>
    %c0_10 = arith.constant 0 : index
    %c0_11 = arith.constant 0 : index
    %12 = vector.load %arg6[%c0_10, %c0_11] : memref<32x1xf32, #tpu.memory_space<vmem>>, vector<32x1xf32>
    %13 = vector.broadcast %12 : vector<32x1xf32> to vector<32x512xf32>
    %14 = arith.addf %11, %13 : vector<32x512xf32>
    %cst_12 = arith.constant 0.000000e+00 : f32
    %15 = vector.broadcast %cst_12 : f32 to vector<32x512xf32>
    %16 = arith.maximumf %14, %15 : vector<32x512xf32>
    %c0_13 = arith.constant 0 : index
    %c0_14 = arith.constant 0 : index
    %17 = vector.load %arg7[%c0_13, %c0_14] : memref<16x32xbf16, #tpu.memory_space<vmem>>, vector<16x32xbf16>
    %18 = arith.truncf %16 : vector<32x512xf32> to vector<32x512xbf16>
    %cst_15 = arith.constant dense<0.000000e+00> : vector<16x512xf32>
    %19 = tpu.matmul %17, %18, %cst_15 {dimension_numbers = #tpu.dot_dimension_numbers<[1], [0], [0], [1], [0, 0, 1, 1], [], []>} : vector<16x32xbf16>, vector<32x512xbf16>, vector<16x512xf32> -> vector<16x512xf32>
    %c0_16 = arith.constant 0 : index
    %c0_17 = arith.constant 0 : index
    %20 = vector.load %arg8[%c0_16, %c0_17] : memref<16x1xf32, #tpu.memory_space<vmem>>, vector<16x1xf32>
    %21 = vector.broadcast %20 : vector<16x1xf32> to vector<16x512xf32>
    %22 = arith.addf %19, %21 : vector<16x512xf32>
    %cst_18 = arith.constant 0.000000e+00 : f32
    %23 = vector.broadcast %cst_18 : f32 to vector<16x512xf32>
    %24 = arith.maximumf %22, %23 : vector<16x512xf32>
    %c0_19 = arith.constant 0 : index
    %c0_20 = arith.constant 0 : index
    %25 = vector.load %arg9[%c0_19, %c0_20] : memref<16x1xf32, #tpu.memory_space<vmem>>, vector<16x1xf32>
    %26 = vector.broadcast %25 : vector<16x1xf32> to vector<16x512xf32>
    %27 = arith.mulf %24, %26 : vector<16x512xf32>
    %cst_21 = arith.constant dense<0.000000e+00> : vector<512xf32>
    %28 = vector.multi_reduction <add>, %27, %cst_21 [0] : vector<16x512xf32> to vector<512xf32>
    %29 = vector.shape_cast %28 : vector<512xf32> to vector<1x512xf32>
    %c0_22 = arith.constant 0 : index
    %c0_23 = arith.constant 0 : index
    %30 = vector.load %arg10[%c0_22, %c0_23] : memref<1x1xf32, #tpu.memory_space<vmem>>, vector<1x1xf32>
    %31 = vector.broadcast %30 : vector<1x1xf32> to vector<1x512xf32>
    %32 = arith.addf %29, %31 : vector<1x512xf32>
    %cst_24 = arith.constant 0.000000e+00 : f32
    %33 = vector.broadcast %cst_24 : f32 to vector<1x512xf32>
    %34 = arith.maximumf %32, %33 : vector<1x512xf32>
    %c0_25 = arith.constant 0 : index
    %c0_26 = arith.constant 0 : index
    %c0_27 = arith.constant 0 : index
    %35 = vector.load %arg11[%c0_25, %c0_26, %c0_27] : memref<1x1x512xf32, #tpu.memory_space<vmem>>, vector<1x1x512xf32>
    %36 = vector.shape_cast %35 : vector<1x1x512xf32> to vector<1x512xf32>
    %37 = vector.shape_cast %34 : vector<1x512xf32> to vector<1x1x512xf32>
    tpu.vector_store %arg11[%c0_25, %c0_26, %c0_27], %37 {strides = array<i32>} : memref<1x1x512xf32, #tpu.memory_space<vmem>>, vector<1x1x512xf32>,
    return
  }
  func.func @transform_0(%arg0: i32, %arg1: i32) -> (i32, i32, i32) {
    %c0_i32 = arith.constant 0 : i32
    %c0_i32_0 = arith.constant 0 : i32
    return %arg0, %c0_i32, %arg1 : i32, i32, i32
  }
  func.func @transform_1(%arg0: i32, %arg1: i32) -> (i32, i32) {
    %c0_i32 = arith.constant 0 : i32
    %c0_i32_0 = arith.constant 0 : i32
    %c0_i32_1 = arith.constant 0 : i32
    return %c0_i32, %c0_i32_0 : i32, i32
  }
  func.func @transform_2(%arg0: i32, %arg1: i32) -> (i32, i32) {
    %c0_i32 = arith.constant 0 : i32
    %c0_i32_0 = arith.constant 0 : i32
    %c0_i32_1 = arith.constant 0 : i32
    return %c0_i32, %c0_i32_0 : i32, i32
  }
  func.func @transform_3(%arg0: i32, %arg1: i32) -> (i32, i32) {
    %c0_i32 = arith.constant 0 : i32
    %c0_i32_0 = arith.constant 0 : i32
    %c0_i32_1 = arith.constant 0 : i32
    return %c0_i32, %c0_i32_0 : i32, i32
  }
  func.func @transform_4(%arg0: i32, %arg1: i32) -> (i32, i32) {
    %c0_i32 = arith.constant 0 : i32
    %c0_i32_0 = arith.constant 0 : i32
    %c0_i32_1 = arith.constant 0 : i32
    return %c0_i32, %c0_i32_0 : i32, i32
  }
  func.func @transform_5(%arg0: i32, %arg1: i32) -> (i32, i32) {
    %c0_i32 = arith.constant 0 : i32
    %c0_i32_0 = arith.constant 0 : i32
    %c0_i32_1 = arith.constant 0 : i32
    return %c0_i32, %c0_i32_0 : i32, i32
  }
  func.func @transform_6(%arg0: i32, %arg1: i32) -> (i32, i32) {
    %c0_i32 = arith.constant 0 : i32
    %c0_i32_0 = arith.constant 0 : i32
    %c0_i32_1 = arith.constant 0 : i32
    return %c0_i32, %c0_i32_0 : i32, i32
  }
  func.func @transform_7(%arg0: i32, %arg1: i32) -> (i32, i32) {
    %c0_i32 = arith.constant 0 : i32
    %c0_i32_0 = arith.constant 0 : i32
    %c0_i32_1 = arith.constant 0 : i32
    return %c0_i32, %c0_i32_0 : i32, i32
  }
  func.func @transform_8(%arg0: i32, %arg1: i32) -> (i32, i32) {
    %c0_i32 = arith.constant 0 : i32
    %c0_i32_0 = arith.constant 0 : i32
    %c0_i32_1 = arith.constant 0 : i32
    return %c0_i32, %c0_i32_0 : i32, i32
  }
  func.func @transform_9(%arg0: i32, %arg1: i32) -> (i32, i32, i32) {
    %c0_i32 = arith.constant 0 : i32
    %c0_i32_0 = arith.constant 0 : i32
    return %arg0, %c0_i32, %arg1 : i32, i32, i32
  }
}

</mosaic_0001>

<llo_original>
// kernel: tpu_custom_call.1
$region0: #{tpu_custom_call.1}
  #allocation0 [shape = 'u32[]', space=smem, size = 0x4, offset = 0x4, fixed_abs, tag = 'smem constant byte address 0x4 - core index']
  #allocation1 [shape = 'u32[144,128]{1,0:T(1,128)}', space=vmem, size = 0x12000, scoped, tag = 'internal scratch']
  #allocation2 [shape = 'f32[1,1]{1,0:T(1,128)S(1)}', space=vmem, size = 0x200, scoped, tag = 'scoped memory for tpu_custom_call.1']
  %s0 = inlined_call_operand.vmem [shape: bf16[2,131,2048], index: 0, kind: input, shape index: {}]
  %s1 = inlined_call_operand.vmem [shape: bf16[64,131], index: 1, kind: input, shape index: {}]
  %s2 = inlined_call_operand.vmem [shape: f32[64,1], index: 2, kind: input, shape index: {}]
  %s3 = inlined_call_operand.vmem [shape: bf16[32,64], index: 3, kind: input, shape index: {}]
  %s4 = inlined_call_operand.vmem [shape: f32[32,1], index: 4, kind: input, shape index: {}]
  %s5 = inlined_call_operand.vmem [shape: bf16[16,32], index: 5, kind: input, shape index: {}]
  %s6 = inlined_call_operand.vmem [shape: f32[16,1], index: 6, kind: input, shape index: {}]
  %s7 = inlined_call_operand.vmem [shape: f32[16,1], index: 7, kind: input, shape index: {}]
  %s8 = inlined_call_operand.<no memory space> [shape: f32[1,1], index: 8, kind: input, shape index: {}]
  %s9 = inlined_call_operand.hbm [shape: f32[2,1,2048], index: 9, kind: output, shape index: {}]
  %s10 = sld [smem:[#allocation0]]
  $region92: #{tpu_custom_call.1} parent=0
    _
  %s12 = ssub.s32 1, %s10
  %s13 = scalar_select 0, %s12, %s10
  %v14 = vstv %s8
  %15 = vst [vmem:[#allocation2] sm:$0x1] %v14
  $region1: #{tpu_custom_call.1} parent=0
    #allocation3 [shape = 'u8[278528]{0}', space=vmem, size = 0x44000, scoped, tag = 'input window, operand 0']
    #allocation4 [shape = 'u8[4096]{0}', space=vmem, size = 0x1000, scoped, tag = 'output window, operand 0']
    #allocation5 [shape = 's32[2]{0}', space=sflag, size = 0x8, scoped, tag = 'scoped memory for tpu_custom_call.1']
    %16 = vsyncpa [#allocation5], 0
    %s17 = scalar_lea.sflag [#allocation5], 1
    %18 = vsyncpa %s17, 0
    loop: start=0, step=1, limit=10
    $region2: #{tpu_custom_call.1} parent=1 // loop_pre_header
      _
    $region3: #{tpu_custom_call.1} parent=1 // loop_header
      %s20 = sphi 0, %s24
      %p21 = scmp.ge.s32.totalorder %s20, 10
      %s27 = sphi 0, %s39
      %s28 = sphi 0, %s35
      %s29 = sphi 0, %s27
      %s30 = sphi 0, %s28
      %s31 = sphi 0, %s29
      %s32 = sphi 0, %s30
      %s44 = sphi 0, %s46
      %s47 = sphi 0, %s44
      %s48 = sphi 0, %s47
      %s64 = sphi 0, %s48
      %s68 = sphi 0, %s68
      %s70 = sphi 0, %s68
      %s71 = sphi 0, %s70
      %s85 = sphi 0, %s71
      %s89 = sphi 0, %s89
      %s91 = sphi 0, %s89
      %s92 = sphi 0, %s91
      %s106 = sphi 0, %s92
      %s110 = sphi 0, %s110
      %s112 = sphi 0, %s110
      %s113 = sphi 0, %s112
      %s127 = sphi 0, %s113
      %s131 = sphi 0, %s131
      %s133 = sphi 0, %s131
      %s134 = sphi 0, %s133
      %s148 = sphi 0, %s134
      %s152 = sphi 0, %s152
      %s154 = sphi 0, %s152
      %s155 = sphi 0, %s154
      %s169 = sphi 0, %s155
      %s173 = sphi 0, %s173
      %s175 = sphi 0, %s173
      %s176 = sphi 0, %s175
      %s190 = sphi 0, %s176
      %s194 = sphi 0, %s194
      %s196 = sphi 0, %s194
      %s197 = sphi 0, %s196
      %s211 = sphi 0, %s197
      %s215 = sphi 0, %s215
      %s217 = sphi 0, %s215
      %s218 = sphi 0, %s217
      %s232 = sphi 0, %s218
      %s240 = sphi 0, %s242
      %s243 = sphi 0, %s240
      %s244 = sphi 0, %s243
      %s260 = sphi 0, %s244
    $region4: #{tpu_custom_call.1} parent=1 // loop_header_branch
      %23 = sbr.rel (%p21) target = $region8
    $region5: #{tpu_custom_call.1} parent=1 // loop_body
      %s25 = ssub.s32 %s20, 1
      %s26 = ssub.s32 %s20, 2
      %s33 = sadd.s32 1, %s28
      %p34 = scmp.ge.s32.totalorder %s33, 4
      %s35 = scalar_select %p34, 0, %s33
      %s36 = sadd.s32 1, %s27
      %s37 = scalar_select %p34, %s36, %s27
      %p38 = scmp.ge.s32.totalorder %s37, 2
      %s39 = scalar_select %p38, 0, %s37
      %s40 = ssub.s32 %s27, %s39
      %s41 = ssub.s32 %s28, %s35
      %s42 = sor.u32 %s40, %s41
      %p43 = scmp.eq.s32.totalorder %s42, 0
      %s45 = sadd.s32 %s44, 1
      %s46 = scalar_select %p43, %s44, %s45
      %p49 = pneg %p43
      %p50 = scmp.eq.s32.totalorder %s20, 7
      %p51 = por %p49, %p50
      %p52 = scmp.ne.s32.totalorder %s44, %s47
      %p53 = scmp.eq.s32.totalorder %s20, 0
      %p54 = por %p52, %p53
      %p55 = scmp.ne.s32.totalorder %s44, %s47
      %p56 = scmp.eq.s32.totalorder %s25, 7
      %p57 = por %p55, %p56
      %p58 = scmp.ne.s32.totalorder %s47, %s48
      %p59 = scmp.eq.s32.totalorder %s25, 0
      %p60 = por %p58, %p59
      %p61 = scmp.ne.s32.totalorder %s47, %s48
      %p62 = scmp.eq.s32.totalorder %s26, 7
      %p63 = por %p61, %p62
      %p65 = scmp.ne.s32.totalorder %s48, %s64
      %p66 = scmp.eq.s32.totalorder %s26, 0
      %p67 = por %p65, %p66
      %s69 = sadd.s32 %s68, 1
      %p72 = scmp.eq.s32.totalorder %s20, 7
      %p73 = scmp.ne.s32.totalorder %s68, %s70
      %p74 = scmp.eq.s32.totalorder %s20, 0
      %p75 = por %p73, %p74
      %p76 = scmp.ne.s32.totalorder %s68, %s70
      %p77 = scmp.eq.s32.totalorder %s25, 7
      %p78 = por %p76, %p77
      %p79 = scmp.ne.s32.totalorder %s70, %s71
      %p80 = scmp.eq.s32.totalorder %s25, 0
      %p81 = por %p79, %p80
      %p82 = scmp.ne.s32.totalorder %s70, %s71
      %p83 = scmp.eq.s32.totalorder %s26, 7
      %p84 = por %p82, %p83
      %p86 = scmp.ne.s32.totalorder %s71, %s85
      %p87 = scmp.eq.s32.totalorder %s26, 0
      %p88 = por %p86, %p87
      %s90 = sadd.s32 %s89, 1
      %p93 = scmp.eq.s32.totalorder %s20, 7
      %p94 = scmp.ne.s32.totalorder %s89, %s91
      %p95 = scmp.eq.s32.totalorder %s20, 0
      %p96 = por %p94, %p95
      %p97 = scmp.ne.s32.totalorder %s89, %s91
      %p98 = scmp.eq.s32.totalorder %s25, 7
      %p99 = por %p97, %p98
      %p100 = scmp.ne.s32.totalorder %s91, %s92
      %p101 = scmp.eq.s32.totalorder %s25, 0
      %p102 = por %p100, %p101
      %p103 = scmp.ne.s32.totalorder %s91, %s92
      %p104 = scmp.eq.s32.totalorder %s26, 7
      %p105 = por %p103, %p104
      %p107 = scmp.ne.s32.totalorder %s92, %s106
      %p108 = scmp.eq.s32.totalorder %s26, 0
      %p109 = por %p107, %p108
      %s111 = sadd.s32 %s110, 1
      %p114 = scmp.eq.s32.totalorder %s20, 7
      %p115 = scmp.ne.s32.totalorder %s110, %s112
      %p116 = scmp.eq.s32.totalorder %s20, 0
      %p117 = por %p115, %p116
      %p118 = scmp.ne.s32.totalorder %s110, %s112
      %p119 = scmp.eq.s32.totalorder %s25, 7
      %p120 = por %p118, %p119
      %p121 = scmp.ne.s32.totalorder %s112, %s113
      %p122 = scmp.eq.s32.totalorder %s25, 0
      %p123 = por %p121, %p122
      %p124 = scmp.ne.s32.totalorder %s112, %s113
      %p125 = scmp.eq.s32.totalorder %s26, 7
      %p126 = por %p124, %p125
      %p128 = scmp.ne.s32.totalorder %s113, %s127
      %p129 = scmp.eq.s32.totalorder %s26, 0
      %p130 = por %p128, %p129
      %s132 = sadd.s32 %s131, 1
      %p135 = scmp.eq.s32.totalorder %s20, 7
      %p136 = scmp.ne.s32.totalorder %s131, %s133
      %p137 = scmp.eq.s32.totalorder %s20, 0
      %p138 = por %p136, %p137
      %p139 = scmp.ne.s32.totalorder %s131, %s133
      %p140 = scmp.eq.s32.totalorder %s25, 7
      %p141 = por %p139, %p140
      %p142 = scmp.ne.s32.totalorder %s133, %s134
      %p143 = scmp.eq.s32.totalorder %s25, 0
      %p144 = por %p142, %p143
      %p145 = scmp.ne.s32.totalorder %s133, %s134
      %p146 = scmp.eq.s32.totalorder %s26, 7
      %p147 = por %p145, %p146
      %p149 = scmp.ne.s32.totalorder %s134, %s148
      %p150 = scmp.eq.s32.totalorder %s26, 0
      %p151 = por %p149, %p150
      %s153 = sadd.s32 %s152, 1
      %p156 = scmp.eq.s32.totalorder %s20, 7
      %p157 = scmp.ne.s32.totalorder %s152, %s154
      %p158 = scmp.eq.s32.totalorder %s20, 0
      %p159 = por %p157, %p158
      %p160 = scmp.ne.s32.totalorder %s152, %s154
      %p161 = scmp.eq.s32.totalorder %s25, 7
      %p162 = por %p160, %p161
      %p163 = scmp.ne.s32.totalorder %s154, %s155
      %p164 = scmp.eq.s32.totalorder %s25, 0
      %p165 = por %p163, %p164
      %p166 = scmp.ne.s32.totalorder %s154, %s155
      %p167 = scmp.eq.s32.totalorder %s26, 7
      %p168 = por %p166, %p167
      %p170 = scmp.ne.s32.totalorder %s155, %s169
      %p171 = scmp.eq.s32.totalorder %s26, 0
      %p172 = por %p170, %p171
      %s174 = sadd.s32 %s173, 1
      %p177 = scmp.eq.s32.totalorder %s20, 7
      %p178 = scmp.ne.s32.totalorder %s173, %s175
      %p179 = scmp.eq.s32.totalorder %s20, 0
      %p180 = por %p178, %p179
      %p181 = scmp.ne.s32.totalorder %s173, %s175
      %p182 = scmp.eq.s32.totalorder %s25, 7
      %p183 = por %p181, %p182
      %p184 = scmp.ne.s32.totalorder %s175, %s176
      %p185 = scmp.eq.s32.totalorder %s25, 0
      %p186 = por %p184, %p185
      %p187 = scmp.ne.s32.totalorder %s175, %s176
      %p188 = scmp.eq.s32.totalorder %s26, 7
      %p189 = por %p187, %p188
      %p191 = scmp.ne.s32.totalorder %s176, %s190
      %p192 = scmp.eq.s32.totalorder %s26, 0
      %p193 = por %p191, %p192
      %s195 = sadd.s32 %s194, 1
      %p198 = scmp.eq.s32.totalorder %s20, 7
      %p199 = scmp.ne.s32.totalorder %s194, %s196
      %p200 = scmp.eq.s32.totalorder %s20, 0
      %p201 = por %p199, %p200
      %p202 = scmp.ne.s32.totalorder %s194, %s196
      %p203 = scmp.eq.s32.totalorder %s25, 7
      %p204 = por %p202, %p203
      %p205 = scmp.ne.s32.totalorder %s196, %s197
      %p206 = scmp.eq.s32.totalorder %s25, 0
      %p207 = por %p205, %p206
      %p208 = scmp.ne.s32.totalorder %s196, %s197
      %p209 = scmp.eq.s32.totalorder %s26, 7
      %p210 = por %p208, %p209
      %p212 = scmp.ne.s32.totalorder %s197, %s211
      %p213 = scmp.eq.s32.totalorder %s26, 0
      %p214 = por %p212, %p213
      %s216 = sadd.s32 %s215, 1
      %p219 = scmp.eq.s32.totalorder %s20, 7
      %p220 = scmp.ne.s32.totalorder %s215, %s217
      %p221 = scmp.eq.s32.totalorder %s20, 0
      %p222 = por %p220, %p221
      %p223 = scmp.ne.s32.totalorder %s215, %s217
      %p224 = scmp.eq.s32.totalorder %s25, 7
      %p225 = por %p223, %p224
      %p226 = scmp.ne.s32.totalorder %s217, %s218
      %p227 = scmp.eq.s32.totalorder %s25, 0
      %p228 = por %p226, %p227
      %p229 = scmp.ne.s32.totalorder %s217, %s218
      %p230 = scmp.eq.s32.totalorder %s26, 7
      %p231 = por %p229, %p230
      %p233 = scmp.ne.s32.totalorder %s218, %s232
      %p234 = scmp.eq.s32.totalorder %s26, 0
      %p235 = por %p233, %p234
      %s236 = ssub.s32 %s27, %s39
      %s237 = ssub.s32 %s28, %s35
      %s238 = sor.u32 %s236, %s237
      %p239 = scmp.eq.s32.totalorder %s238, 0
      %s241 = sadd.s32 %s240, 1
      %s242 = scalar_select %p239, %s240, %s241
      %p245 = pneg %p239
      %p246 = scmp.eq.s32.totalorder %s20, 7
      %p247 = por %p245, %p246
      %p248 = scmp.ne.s32.totalorder %s240, %s243
      %p249 = scmp.eq.s32.totalorder %s20, 0
      %p250 = por %p248, %p249
      %p251 = scmp.ne.s32.totalorder %s240, %s243
      %p252 = scmp.eq.s32.totalorder %s25, 7
      %p253 = por %p251, %p252
      %p254 = scmp.ne.s32.totalorder %s243, %s244
      %p255 = scmp.eq.s32.totalorder %s25, 0
      %p256 = por %p254, %p255
      %p257 = scmp.ne.s32.totalorder %s243, %s244
      %p258 = scmp.eq.s32.totalorder %s26, 7
      %p259 = por %p257, %p258
      %p261 = scmp.ne.s32.totalorder %s244, %s260
      %p262 = scmp.eq.s32.totalorder %s26, 0
      %p263 = por %p261, %p262
      %p264 = scmp.le.s32.totalorder 1, %s20
      %p265 = scmp.lt.s32.totalorder %s20, 9
      %p266 = pnand %p264, %p265
      %p267 = pneg %p266
      // Predicated region
      $region9: #{tpu_custom_call.1} parent=5 // pred_check
        _
      $region10: #{tpu_custom_call.1} parent=5 // pred_check_branch
        %269 = sbr.rel (%p266) target = $region12
      $region11: #{tpu_custom_call.1} parent=5 // pred_region
        %s270 = ssub.s32 %s20, 1
        // Predicated region
        $region13: #{tpu_custom_call.1} parent=11 // pred_check
          %p271 = pneg %p81
        $region14: #{tpu_custom_call.1} parent=11 // pred_check_branch
          %273 = sbr.rel (%p271) target = $region16
        $region15: #{tpu_custom_call.1} parent=11 // pred_region
          _
        $region16: #{tpu_custom_call.1} parent=11 // pred_fallthru
          _
        // Predicated region
        $region17: #{tpu_custom_call.1} parent=11 // pred_check
          %p274 = pneg %p102
        $region18: #{tpu_custom_call.1} parent=11 // pred_check_branch
          %276 = sbr.rel (%p274) target = $region20
        $region19: #{tpu_custom_call.1} parent=11 // pred_region
          _
        $region20: #{tpu_custom_call.1} parent=11 // pred_fallthru
          _
        // Predicated region
        $region21: #{tpu_custom_call.1} parent=11 // pred_check
          %p277 = pneg %p123
        $region22: #{tpu_custom_call.1} parent=11 // pred_check_branch
          %279 = sbr.rel (%p277) target = $region24
        $region23: #{tpu_custom_call.1} parent=11 // pred_region
          _
        $region24: #{tpu_custom_call.1} parent=11 // pred_fallthru
          _
        // Predicated region
        $region25: #{tpu_custom_call.1} parent=11 // pred_check
          %p280 = pneg %p144
        $region26: #{tpu_custom_call.1} parent=11 // pred_check_branch
          %282 = sbr.rel (%p280) target = $region28
        $region27: #{tpu_custom_call.1} parent=11 // pred_region
          _
        $region28: #{tpu_custom_call.1} parent=11 // pred_fallthru
          _
        // Predicated region
        $region29: #{tpu_custom_call.1} parent=11 // pred_check
          %p283 = pneg %p165
        $region30: #{tpu_custom_call.1} parent=11 // pred_check_branch
          %285 = sbr.rel (%p283) target = $region32
        $region31: #{tpu_custom_call.1} parent=11 // pred_region
          _
        $region32: #{tpu_custom_call.1} parent=11 // pred_fallthru
          _
        // Predicated region
        $region33: #{tpu_custom_call.1} parent=11 // pred_check
          %p286 = pneg %p186
        $region34: #{tpu_custom_call.1} parent=11 // pred_check_branch
          %288 = sbr.rel (%p286) target = $region36
        $region35: #{tpu_custom_call.1} parent=11 // pred_region
          _
        $region36: #{tpu_custom_call.1} parent=11 // pred_fallthru
          _
        // Predicated region
        $region37: #{tpu_custom_call.1} parent=11 // pred_check
          %p289 = pneg %p207
        $region38: #{tpu_custom_call.1} parent=11 // pred_check_branch
          %291 = sbr.rel (%p289) target = $region40
        $region39: #{tpu_custom_call.1} parent=11 // pred_region
          _
        $region40: #{tpu_custom_call.1} parent=11 // pred_fallthru
          _
        // Predicated region
        $region41: #{tpu_custom_call.1} parent=11 // pred_check
          %p292 = pneg %p228
        $region42: #{tpu_custom_call.1} parent=11 // pred_check_branch
          %294 = sbr.rel (%p292) target = $region44
        $region43: #{tpu_custom_call.1} parent=11 // pred_region
          _
        $region44: #{tpu_custom_call.1} parent=11 // pred_fallthru
          _
      $region12: #{tpu_custom_call.1} parent=5 // pred_fallthru
        _
      %p295 = scmp.lt.s32.totalorder %s20, 8
      // Predicated region
      $region45: #{tpu_custom_call.1} parent=5 // pred_check
        %p296 = pneg %p295
      $region46: #{tpu_custom_call.1} parent=5 // pred_check_branch
        %298 = sbr.rel (%p296) target = $region48
      $region47: #{tpu_custom_call.1} parent=5 // pred_region
        // Predicated region
        $region49: #{tpu_custom_call.1} parent=47 // pred_check
          %p299 = pneg %p54
        $region50: #{tpu_custom_call.1} parent=47 // pred_check_branch
          %301 = sbr.rel (%p299) target = $region52
        $region51: #{tpu_custom_call.1} parent=47 // pred_region
          %s302 = sand.u32 %s44, 1
          %s303 = sand.u32 %s44, 1
          %s304 = smul.addr %s303, 272
          %s305 = scalar_lea.vmem [#allocation3], %s304
          %s306 = smul.u32 4, %s28
          %s307 = smul.addr %s27, 272
          %s308 = sadd.s32 %s306, %s307
          %s309 = smul.addr %s308, 4
          %s310 = scalar_lea.vmem %s0, %s309
          // Predicated region
          $region53: #{tpu_custom_call.1} parent=51 // pred_check
            _
          $region54: #{tpu_custom_call.1} parent=51 // pred_check_branch
            %312 = sbr.rel (0) target = $region56
          $region55: #{tpu_custom_call.1} parent=51 // pred_region
            // Predicated region
            $region57: #{tpu_custom_call.1} parent=55 // pred_check
              _
            $region58: #{tpu_custom_call.1} parent=55 // pred_check_branch
              %314 = sbr.rel (0) target = $region60
            $region59: #{tpu_custom_call.1} parent=55 // pred_region
              loop: start=0, step=1, limit=1
              $region61: #{tpu_custom_call.1} parent=59 // loop_pre_header
                _
              $region62: #{tpu_custom_call.1} parent=59 // loop_header
                %s316 = sphi 0, %s320
                %p317 = scmp.ge.s32.totalorder %s316, 1
                %s321 = sphi %s310, %s310
                %s322 = sphi %s305, %s305
              $region63: #{tpu_custom_call.1} parent=59 // loop_header_branch
                %319 = sbr.rel (%p317) target = $region67
              $region64: #{tpu_custom_call.1} parent=59 // loop_body
                %v323 = vld [vmem:[%s321] sm:$0xff]
                %324 = vst [vmem:[%s322] sm:$0xff] %v323
                %v325 = vld [vmem:[%s321 + $0x8] sm:$0xff]
                %326 = vst [vmem:[%s322 + $0x8] sm:$0xff] %v325
                %v327 = vld [vmem:[%s321 + $0x40] sm:$0xff]
                %328 = vst [vmem:[%s322 + $0x10] sm:$0xff] %v327
                %v329 = vld [vmem:[%s321 + $0x48] sm:$0xff]
                %330 = vst [vmem:[%s322 + $0x18] sm:$0xff] %v329
                %v331 = vld [vmem:[%s321 + $0x80] sm:$0xff]
                %332 = vst [vmem:[%s322 + $0x20] sm:$0xff] %v331
                %v333 = vld [vmem:[%s321 + $0x88] sm:$0xff]
                %334 = vst [vmem:[%s322 + $0x28] sm:$0xff] %v333
                %v335 = vld [vmem:[%s321 + $0xc0] sm:$0xff]
                %336 = vst [vmem:[%s322 + $0x30] sm:$0xff] %v335
                %v337 = vld [vmem:[%s321 + $0xc8] sm:$0xff]
                %338 = vst [vmem:[%s322 + $0x38] sm:$0xff] %v337
                %v339 = vld [vmem:[%s321 + $0x100] sm:$0xff]
                %340 = vst [vmem:[%s322 + $0x40] sm:$0xff] %v339
                %v341 = vld [vmem:[%s321 + $0x108] sm:$0xff]
                %342 = vst [vmem:[%s322 + $0x48] sm:$0xff] %v341
                %v343 = vld [vmem:[%s321 + $0x140] sm:$0xff]
                %344 = vst [vmem:[%s322 + $0x50] sm:$0xff] %v343
                %v345 = vld [vmem:[%s321 + $0x148] sm:$0xff]
                %346 = vst [vmem:[%s322 + $0x58] sm:$0xff] %v345
                %v347 = vld [vmem:[%s321 + $0x180] sm:$0xff]
                %348 = vst [vmem:[%s322 + $0x60] sm:$0xff] %v347
                %v349 = vld [vmem:[%s321 + $0x188] sm:$0xff]
                %350 = vst [vmem:[%s322 + $0x68] sm:$0xff] %v349
                %v351 = vld [vmem:[%s321 + $0x1c0] sm:$0xff]
                %352 = vst [vmem:[%s322 + $0x70] sm:$0xff] %v351
                %v353 = vld [vmem:[%s321 + $0x1c8] sm:$0xff]
                %354 = vst [vmem:[%s322 + $0x78] sm:$0xff] %v353
                %v355 = vld [vmem:[%s321 + $0x200] sm:$0xff]
                %356 = vst [vmem:[%s322 + $0x80] sm:$0xff] %v355
                %v357 = vld [vmem:[%s321 + $0x208] sm:$0xff]
                %358 = vst [vmem:[%s322 + $0x88] sm:$0xff] %v357
                %v359 = vld [vmem:[%s321 + $0x240] sm:$0xff]
                %360 = vst [vmem:[%s322 + $0x90] sm:$0xff] %v359
                %v361 = vld [vmem:[%s321 + $0x248] sm:$0xff]
                %362 = vst [vmem:[%s322 + $0x98] sm:$0xff] %v361
                %v363 = vld [vmem:[%s321 + $0x280] sm:$0xff]
                %364 = vst [vmem:[%s322 + $0xa0] sm:$0xff] %v363
                %v365 = vld [vmem:[%s321 + $0x288] sm:$0xff]
                %366 = vst [vmem:[%s322 + $0xa8] sm:$0xff] %v365
                %v367 = vld [vmem:[%s321 + $0x2c0] sm:$0xff]
                %368 = vst [vmem:[%s322 + $0xb0] sm:$0xff] %v367
                %v369 = vld [vmem:[%s321 + $0x2c8] sm:$0xff]
                %370 = vst [vmem:[%s322 + $0xb8] sm:$0xff] %v369
                %v371 = vld [vmem:[%s321 + $0x300] sm:$0xff]
                %372 = vst [vmem:[%s322 + $0xc0] sm:$0xff] %v371
                %v373 = vld [vmem:[%s321 + $0x308] sm:$0xff]
                %374 = vst [vmem:[%s322 + $0xc8] sm:$0xff] %v373
                %v375 = vld [vmem:[%s321 + $0x340] sm:$0xff]
                %376 = vst [vmem:[%s322 + $0xd0] sm:$0xff] %v375
                %v377 = vld [vmem:[%s321 + $0x348] sm:$0xff]
                %378 = vst [vmem:[%s322 + $0xd8] sm:$0xff] %v377
                %v379 = vld [vmem:[%s321 + $0x380] sm:$0xff]
                %380 = vst [vmem:[%s322 + $0xe0] sm:$0xff] %v379
                %v381 = vld [vmem:[%s321 + $0x388] sm:$0xff]
                %382 = vst [vmem:[%s322 + $0xe8] sm:$0xff] %v381
                %v383 = vld [vmem:[%s321 + $0x3c0] sm:$0xff]
                %384 = vst [vmem:[%s322 + $0xf0] sm:$0xff] %v383
                %v385 = vld [vmem:[%s321 + $0x3c8] sm:$0xff]
                %386 = vst [vmem:[%s322 + $0xf8] sm:$0xff] %v385
                %v387 = vld [vmem:[%s321 + $0x400] sm:$0xff]
                %388 = vst [vmem:[%s322 + $0x100] sm:$0xff] %v387
                %v389 = vld [vmem:[%s321 + $0x408] sm:$0xff]
                %390 = vst [vmem:[%s322 + $0x108] sm:$0xff] %v389
              $region65: #{tpu_custom_call.1} parent=59 // loop_footer
                %s320 = sadd.s32 1, %s316
              $region66: #{tpu_custom_call.1} parent=59 // loop_footer_branch
                %315 = sbr.rel target = $region62
              $region67: #{tpu_custom_call.1} parent=59 // loop_exit
                _
            $region60: #{tpu_custom_call.1} parent=55 // pred_fallthru
              _
            // Predicated region
            $region68: #{tpu_custom_call.1} parent=55 // pred_check
              _
            $region69: #{tpu_custom_call.1} parent=55 // pred_check_branch
              %392 = sbr.rel target = $region71
            $region70: #{tpu_custom_call.1} parent=55 // pred_region
              _
            $region71: #{tpu_custom_call.1} parent=55 // pred_fallthru
              _
          $region56: #{tpu_custom_call.1} parent=51 // pred_fallthru
            _
          %393 = vnop
        $region52: #{tpu_custom_call.1} parent=47 // pred_fallthru
          _
      $region48: #{tpu_custom_call.1} parent=5 // pred_fallthru
        _
      %p394 = scmp.le.s32.totalorder 1, %s20
      %p395 = scmp.lt.s32.totalorder %s20, 9
      %p396 = pnand %p394, %p395
      %p397 = pneg %p396
      // Predicated region
      $region72: #{tpu_custom_call.1} parent=5 // pred_check
        _
      $region73: #{tpu_custom_call.1} parent=5 // pred_check_branch
        %399 = sbr.rel (%p396) target = $region75
      $region74: #{tpu_custom_call.1} parent=5 // pred_region
        %s400 = ssub.s32 %s20, 1
        %s401 = sand.u32 %s47, 1
        %s402 = sand.u32 %s47, 1
        %s403 = smul.addr %s402, 272
        %s404 = scalar_lea.vmem [#allocation3], %s403
        // Predicated region
        $region76: #{tpu_custom_call.1} parent=74 // pred_check
          %p405 = pneg %p60
        $region77: #{tpu_custom_call.1} parent=74 // pred_check_branch
          %407 = sbr.rel (%p405) target = $region79
        $region78: #{tpu_custom_call.1} parent=74 // pred_region
          _
        $region79: #{tpu_custom_call.1} parent=74 // pred_fallthru
          _
        %s408 = sand.u32 %s47, 1
        %s409 = sand.u32 %s47, 1
        %s410 = smul.addr %s409, 272
        %s411 = scalar_lea.vmem [#allocation3], %s410
        %p412 = pneg %p60
        %p413 = pneg %p57
        %p414 = pneg %p81
        %p415 = pneg %p78
        %p416 = pneg %p102
        %p417 = pneg %p99
        %p418 = pneg %p123
        %p419 = pneg %p120
        %p420 = pneg %p144
        %p421 = pneg %p141
        %p422 = pneg %p165
        %p423 = pneg %p162
        %p424 = pneg %p186
        %p425 = pneg %p183
        %p426 = pneg %p207
        %p427 = pneg %p204
        %p428 = pneg %p228
        %p429 = pneg %p225
        %p430 = pneg %p256
        %p431 = pneg %p253
        %s432 = sand.u32 %s243, 1
        %s433 = scalar_lea.sflag [#allocation5], %s432
        %s434 = sand.u32 %s243, 1
        %s435 = smul.addr %s434, 4
        %s436 = scalar_lea.vmem [#allocation4], %s435
        %s437 = smul.u32 4, %s30
        %s438 = smul.u32 4, %s30
        %v440 = vld [vmem:[%s404] sm:$0xff]
        %v441 = vld [vmem:[%s404 + $0x8] sm:$0xff]
        %v442 = vld [vmem:[%s404 + $0x10] sm:$0xff]
        %v443 = vld [vmem:[%s404 + $0x18] sm:$0xff]
        %v444 = vld [vmem:[%s404 + $0x20] sm:$0xff]
        %v445 = vld [vmem:[%s404 + $0x28] sm:$0xff]
        %v446 = vld [vmem:[%s404 + $0x30] sm:$0xff]
        %v447 = vld [vmem:[%s404 + $0x38] sm:$0xff]
        %v448 = vld [vmem:[%s404 + $0x40] sm:$0xff]
        %v449 = vld [vmem:[%s404 + $0x48] sm:$0xff]
        %v450 = vld [vmem:[%s404 + $0x50] sm:$0xff]
        %v451 = vld [vmem:[%s404 + $0x58] sm:$0xff]
        %v452 = vld [vmem:[%s404 + $0x60] sm:$0xff]
        %v453 = vld [vmem:[%s404 + $0x68] sm:$0xff]
        %v454 = vld [vmem:[%s404 + $0x70] sm:$0xff]
        %v455 = vld [vmem:[%s404 + $0x78] sm:$0xff]
        %v456 = vld [vmem:[%s404 + $0x80] sm:$0xff]
        %v457 = vld [vmem:[%s404 + $0x88] sm:$0xff]
        %v458 = vld [vmem:[%s404 + $0x90] sm:$0xff]
        %v459 = vld [vmem:[%s404 + $0x98] sm:$0xff]
        %v460 = vld [vmem:[%s404 + $0xa0] sm:$0xff]
        %v461 = vld [vmem:[%s404 + $0xa8] sm:$0xff]
        %v462 = vld [vmem:[%s404 + $0xb0] sm:$0xff]
        %v463 = vld [vmem:[%s404 + $0xb8] sm:$0xff]
        %v464 = vld [vmem:[%s404 + $0xc0] sm:$0xff]
        %v465 = vld [vmem:[%s404 + $0xc8] sm:$0xff]
        %v466 = vld [vmem:[%s404 + $0xd0] sm:$0xff]
        %v467 = vld [vmem:[%s404 + $0xd8] sm:$0xff]
        %v468 = vld [vmem:[%s404 + $0xe0] sm:$0xff]
        %v469 = vld [vmem:[%s404 + $0xe8] sm:$0xff]
        %v470 = vld [vmem:[%s404 + $0xf0] sm:$0xff]
        %v471 = vld [vmem:[%s404 + $0xf8] sm:$0xff]
        %v472 = vld [vmem:[%s404 + $0x100] sm:$0x33]
        %v473 = vld [vmem:[%s404 + $0x108] sm:$0x33]
        %v474 = vld [vmem:[%s1] sm:$0xff]
        %v475 = vld [vmem:[%s1 + $0x8] sm:$0xff]
        %v476 = vld [vmem:[%s1 + $0x10] sm:$0xff]
        %v477 = vld [vmem:[%s1 + $0x18] sm:$0xff]
        %v478 = vld [vmem:[%s1 + $0x20] sm:$0xff]
        %v479 = vld [vmem:[%s1 + $0x28] sm:$0xff]
        %v480 = vld [vmem:[%s1 + $0x30] sm:$0xff]
        %v481 = vld [vmem:[%s1 + $0x38] sm:$0xff]
        %v482 = vld [vmem:[%s2] sm:$0xff]
        %v483 = vld [vmem:[%s2 + $0x8] sm:$0xff]
        %v484 = vld [vmem:[%s2 + $0x10] sm:$0xff]
        %v485 = vld [vmem:[%s2 + $0x18] sm:$0xff]
        %v486 = vld [vmem:[%s2 + $0x20] sm:$0xff]
        %v487 = vld [vmem:[%s2 + $0x28] sm:$0xff]
        %v488 = vld [vmem:[%s2 + $0x30] sm:$0xff]
        %v489 = vld [vmem:[%s2 + $0x38] sm:$0xff]
        %491 = vset.pattern.permute.xlu0 0
        %492 = vperm.xlu0 %491, %v482
        %v493 = vpop.permute.xlu0 %492
        %496 = vset.pattern.permute.xlu0 0
        %497 = vperm.xlu0 %496, %v483
        %v498 = vpop.permute.xlu0 %497
        %501 = vset.pattern.permute.xlu0 0
        %502 = vperm.xlu0 %501, %v484
        %v503 = vpop.permute.xlu0 %502
        %506 = vset.pattern.permute.xlu0 0
        %507 = vperm.xlu0 %506, %v485
        %v508 = vpop.permute.xlu0 %507
        %511 = vset.pattern.permute.xlu0 0
        %512 = vperm.xlu0 %511, %v486
        %v513 = vpop.permute.xlu0 %512
        %516 = vset.pattern.permute.xlu0 0
        %517 = vperm.xlu0 %516, %v487
        %v518 = vpop.permute.xlu0 %517
        %521 = vset.pattern.permute.xlu0 0
        %522 = vperm.xlu0 %521, %v488
        %v523 = vpop.permute.xlu0 %522
        %526 = vset.pattern.permute.xlu0 0
        %527 = vperm.xlu0 %526, %v489
        %v528 = vpop.permute.xlu0 %527
        %v538 = vunpack.c.l.b16 %v474
        %v539 = vunpack.c.h.b16 %v474
        %v540 = vunpack.c.l.b16 %v475
        %v541 = vunpack.c.h.b16 %v475
        %v542 = vunpack.c.l.b16 %v476
        %v543 = vunpack.c.h.b16 %v476
        %v544 = vunpack.c.l.b16 %v477
        %v545 = vunpack.c.h.b16 %v477
        %v546 = vunpack.c.l.b16 %v478
        %v547 = vunpack.c.h.b16 %v478
        %v548 = vunpack.c.l.b16 %v479
        %v549 = vunpack.c.h.b16 %v479
        %v550 = vunpack.c.l.b16 %v480
        %v551 = vunpack.c.h.b16 %v480
        %v552 = vunpack.c.l.b16 %v481
        %v553 = vunpack.c.h.b16 %v481
        %v554 = vpack.c.b16 %v540, %v538
        %v555 = vpack.c.b16 %v541, %v539
        %v556 = vpack.c.b16 %v544, %v542
        %v557 = vpack.c.b16 %v545, %v543
        %v558 = vpack.c.b16 %v548, %v546
        %v559 = vpack.c.b16 %v549, %v547
        %v560 = vpack.c.b16 %v552, %v550
        %v561 = vpack.c.b16 %v553, %v551
        %v600 = vunpack.c.l.b16 %v440
        %v601 = vunpack.c.h.b16 %v440
        %v602 = vunpack.c.l.b16 %v441
        %v603 = vunpack.c.h.b16 %v441
        %v604 = vunpack.c.l.b16 %v442
        %v605 = vunpack.c.h.b16 %v442
        %v606 = vunpack.c.l.b16 %v443
        %v607 = vunpack.c.h.b16 %v443
        %v608 = vunpack.c.l.b16 %v444
        %v609 = vunpack.c.h.b16 %v444
        %v610 = vunpack.c.l.b16 %v445
        %v611 = vunpack.c.h.b16 %v445
        %v612 = vunpack.c.l.b16 %v446
        %v613 = vunpack.c.h.b16 %v446
        %v614 = vunpack.c.l.b16 %v447
        %v615 = vunpack.c.h.b16 %v447
        %v616 = vunpack.c.l.b16 %v448
        %v617 = vunpack.c.h.b16 %v448
        %v618 = vunpack.c.l.b16 %v449
        %v619 = vunpack.c.h.b16 %v449
        %v620 = vunpack.c.l.b16 %v450
        %v621 = vunpack.c.h.b16 %v450
        %v622 = vunpack.c.l.b16 %v451
        %v623 = vunpack.c.h.b16 %v451
        %v624 = vunpack.c.l.b16 %v452
        %v625 = vunpack.c.h.b16 %v452
        %v626 = vunpack.c.l.b16 %v453
        %v627 = vunpack.c.h.b16 %v453
        %v628 = vunpack.c.l.b16 %v454
        %v629 = vunpack.c.h.b16 %v454
        %v630 = vunpack.c.l.b16 %v455
        %v631 = vunpack.c.h.b16 %v455
        %v632 = vunpack.c.l.b16 %v456
        %v633 = vunpack.c.h.b16 %v456
        %v634 = vunpack.c.l.b16 %v457
        %v635 = vunpack.c.h.b16 %v457
        %v636 = vunpack.c.l.b16 %v458
        %v637 = vunpack.c.h.b16 %v458
        %v638 = vunpack.c.l.b16 %v459
        %v639 = vunpack.c.h.b16 %v459
        %v640 = vunpack.c.l.b16 %v460
        %v641 = vunpack.c.h.b16 %v460
        %v642 = vunpack.c.l.b16 %v461
        %v643 = vunpack.c.h.b16 %v461
        %v644 = vunpack.c.l.b16 %v462
        %v645 = vunpack.c.h.b16 %v462
        %v646 = vunpack.c.l.b16 %v463
        %v647 = vunpack.c.h.b16 %v463
        %v648 = vunpack.c.l.b16 %v464
        %v649 = vunpack.c.h.b16 %v464
        %v650 = vunpack.c.l.b16 %v465
        %v651 = vunpack.c.h.b16 %v465
        %v652 = vunpack.c.l.b16 %v466
        %v653 = vunpack.c.h.b16 %v466
        %v654 = vunpack.c.l.b16 %v467
        %v655 = vunpack.c.h.b16 %v467
        %v656 = vunpack.c.l.b16 %v468
        %v657 = vunpack.c.h.b16 %v468
        %v658 = vunpack.c.l.b16 %v469
        %v659 = vunpack.c.h.b16 %v469
        %v660 = vunpack.c.l.b16 %v470
        %v661 = vunpack.c.h.b16 %v470
        %v662 = vunpack.c.l.b16 %v471
        %v663 = vunpack.c.h.b16 %v471
        %v664 = vunpack.c.l.b16 %v472
        %v665 = vunpack.c.h.b16 %v472
        %v666 = vunpack.c.l.b16 %v473
        %v667 = vunpack.c.h.b16 %v473
        %v668 = vpack.c.b16 %v604, %v600
        %v669 = vpack.c.b16 %v605, %v601
        %v670 = vpack.c.b16 %v606, %v602
        %v671 = vpack.c.b16 %v607, %v603
        %v672 = vpack.c.b16 %v612, %v608
        %v673 = vpack.c.b16 %v613, %v609
        %v674 = vpack.c.b16 %v614, %v610
        %v675 = vpack.c.b16 %v615, %v611
        %v676 = vpack.c.b16 %v620, %v616
        %v677 = vpack.c.b16 %v621, %v617
        %v678 = vpack.c.b16 %v622, %v618
        %v679 = vpack.c.b16 %v623, %v619
        %v680 = vpack.c.b16 %v628, %v624
        %v681 = vpack.c.b16 %v629, %v625
        %v682 = vpack.c.b16 %v630, %v626
        %v683 = vpack.c.b16 %v631, %v627
        %v684 = vpack.c.b16 %v636, %v632
        %v685 = vpack.c.b16 %v637, %v633
        %v686 = vpack.c.b16 %v638, %v634
        %v687 = vpack.c.b16 %v639, %v635
        %v688 = vpack.c.b16 %v644, %v640
        %v689 = vpack.c.b16 %v645, %v641
        %v690 = vpack.c.b16 %v646, %v642
        %v691 = vpack.c.b16 %v647, %v643
        %v692 = vpack.c.b16 %v652, %v648
        %v693 = vpack.c.b16 %v653, %v649
        %v694 = vpack.c.b16 %v654, %v650
        %v695 = vpack.c.b16 %v655, %v651
        %v696 = vpack.c.b16 %v660, %v656
        %v697 = vpack.c.b16 %v661, %v657
        %v698 = vpack.c.b16 %v662, %v658
        %v699 = vpack.c.b16 %v663, %v659
        %v700 = vpack.c.b16 %v664, %v664
        %v701 = vpack.c.b16 %v665, %v665
        %v702 = vpack.c.b16 %v666, %v666
        %v703 = vpack.c.b16 %v667, %v667
        %vm736 = vcmask 23552
        %v738 = vsel %vm736, %v555, 0
        %v741 = vsel %vm736, %v557, 0
        %v744 = vsel %vm736, %v559, 0
        %v747 = vsel %vm736, %v561, 0
        %vm749 = vcmask 1040384
        %vm750 = vcmask 1041408
        %v751 = vsel %vm749, 4294967295, 65535
        %v752 = vsel %vm750, %v751, 0
        %v754 = vand.u32 %v700, %v752
        %v757 = vand.u32 %v701, %v752
        %v760 = vand.u32 %v702, %v752
        %v763 = vand.u32 %v703, %v752
        %765 = vmatprep.subr.bf16.mxu0 %v697
        %766 = vmatpush1.bf16.msra.mxu0 %v696
        %767 = vmatprep.subr.bf16.mxu0 %v693
        %768 = vmatpush1.bf16.msra.mxu0 %v692
        %769 = vmatprep.subr.bf16.mxu0 %v689
        %770 = vmatpush1.bf16.msra.mxu0 %v688
        %771 = vmatprep.subr.bf16.mxu0 %v685
        %772 = vmatpush1.bf16.msra.mxu0 %v684
        %773 = vmatprep.subr.bf16.mxu0 %v681
        %774 = vmatpush1.bf16.msra.mxu0 %v680
        %775 = vmatprep.subr.bf16.mxu0 %v677
        %776 = vmatpush1.bf16.msra.mxu0 %v676
        %777 = vmatprep.subr.bf16.mxu0 %v673
        %778 = vmatpush1.bf16.msra.mxu0 %v672
        %779 = vmatprep.subr.bf16.mxu0 %v669
        %780 = vmatpush1.bf16.msra.mxu0 %v668
        %781 = vmatprep.subr.bf16.mxu0 0
        %782 = vmatpush2.bf16.msra.mxu0 0
        %783 = vmatprep.subr.bf16.mxu0 0
        %784 = vmatpush2.bf16.msra.mxu0 0
        %785 = vmatprep.subr.bf16.mxu0 0
        %786 = vmatpush2.bf16.msra.mxu0 0
        %787 = vmatprep.subr.bf16.mxu0 0
        %788 = vmatpush2.bf16.msra.mxu0 0
        %789 = vmatprep.subr.bf16.mxu0 0
        %790 = vmatpush2.bf16.msra.mxu0 0
        %791 = vmatprep.subr.bf16.mxu0 0
        %792 = vmatpush2.bf16.msra.mxu0 0
        %793 = vmatprep.subr.bf16.mxu0 0
        %794 = vmatpush2.bf16.msra.mxu0 0
        %795 = vmatprep.subr.bf16.mxu0 %v757
        %796 = vmatpush2.bf16.msra.mxu0 %v754
        %797 = vmatprep.mubr.bf16.mxu0 %v738
        %798 = vmatmul.mubr.bf16.gmra.mxu0 %v554
        %v799 = vpop.f32.mrf.mxu0
        %v800 = vadd.f32 %v493, %v799
        %v801 = vpop.f32.mrf.mxu0
        %v802 = vadd.f32 %v493, %v801
        %v803 = vpop.f32.mrf.mxu0
        %v804 = vadd.f32 %v498, %v803
        %v805 = vpop.f32.mrf.mxu0
        %v806 = vadd.f32 %v498, %v805
        %807 = vmatprep.mubr.bf16.mxu0 %v741
        %808 = vmatmul.mubr.bf16.gmra.mxu0 %v556
        %v809 = vpop.f32.mrf.mxu0
        %v810 = vadd.f32 %v503, %v809
        %v811 = vpop.f32.mrf.mxu0
        %v812 = vadd.f32 %v503, %v811
        %v813 = vpop.f32.mrf.mxu0
        %v814 = vadd.f32 %v508, %v813
        %v815 = vpop.f32.mrf.mxu0
        %v816 = vadd.f32 %v508, %v815
        %817 = vmatprep.mubr.bf16.mxu0 %v744
        %818 = vmatmul.mubr.bf16.gmra.mxu0 %v558
        %v819 = vpop.f32.mrf.mxu0
        %v820 = vadd.f32 %v513, %v819
        %v821 = vpop.f32.mrf.mxu0
        %v822 = vadd.f32 %v513, %v821
        %v823 = vpop.f32.mrf.mxu0
        %v824 = vadd.f32 %v518, %v823
        %v825 = vpop.f32.mrf.mxu0
        %v826 = vadd.f32 %v518, %v825
        %827 = vmatprep.mubr.bf16.mxu0 %v747
        %828 = vmatmul.mubr.bf16.gmra.mxu0 %v560
        %v829 = vpop.f32.mrf.mxu0
        %v830 = vadd.f32 %v523, %v829
        %v831 = vpop.f32.mrf.mxu0
        %v832 = vadd.f32 %v523, %v831
        %v833 = vpop.f32.mrf.mxu0
        %v834 = vadd.f32 %v528, %v833
        %v835 = vpop.f32.mrf.mxu0
        %v836 = vadd.f32 %v528, %v835
        %837 = vdwg.mxu0
        %838 = vmatprep.subr.bf16.mxu0 %v699
        %839 = vmatpush1.bf16.msra.mxu0 %v698
        %840 = vmatprep.subr.bf16.mxu0 %v695
        %841 = vmatpush1.bf16.msra.mxu0 %v694
        %842 = vmatprep.subr.bf16.mxu0 %v691
        %843 = vmatpush1.bf16.msra.mxu0 %v690
        %844 = vmatprep.subr.bf16.mxu0 %v687
        %845 = vmatpush1.bf16.msra.mxu0 %v686
        %846 = vmatprep.subr.bf16.mxu0 %v683
        %847 = vmatpush1.bf16.msra.mxu0 %v682
        %848 = vmatprep.subr.bf16.mxu0 %v679
        %849 = vmatpush1.bf16.msra.mxu0 %v678
        %850 = vmatprep.subr.bf16.mxu0 %v675
        %851 = vmatpush1.bf16.msra.mxu0 %v674
        %852 = vmatprep.subr.bf16.mxu0 %v671
        %853 = vmatpush1.bf16.msra.mxu0 %v670
        %854 = vmatprep.subr.bf16.mxu0 0
        %855 = vmatpush2.bf16.msra.mxu0 0
        %856 = vmatprep.subr.bf16.mxu0 0
        %857 = vmatpush2.bf16.msra.mxu0 0
        %858 = vmatprep.subr.bf16.mxu0 0
        %859 = vmatpush2.bf16.msra.mxu0 0
        %860 = vmatprep.subr.bf16.mxu0 0
        %861 = vmatpush2.bf16.msra.mxu0 0
        %862 = vmatprep.subr.bf16.mxu0 0
        %863 = vmatpush2.bf16.msra.mxu0 0
        %864 = vmatprep.subr.bf16.mxu0 0
        %865 = vmatpush2.bf16.msra.mxu0 0
        %866 = vmatprep.subr.bf16.mxu0 0
        %867 = vmatpush2.bf16.msra.mxu0 0
        %868 = vmatprep.subr.bf16.mxu0 %v763
        %869 = vmatpush2.bf16.msra.mxu0 %v760
        %870 = vmatprep.mubr.bf16.mxu0 %v738
        %871 = vmatmul.mubr.bf16.gmra.mxu0 %v554
        %v872 = vpop.f32.mrf.mxu0
        %v873 = vadd.f32 %v493, %v872
        %v874 = vpop.f32.mrf.mxu0
        %v875 = vadd.f32 %v493, %v874
        %v876 = vpop.f32.mrf.mxu0
        %v877 = vadd.f32 %v498, %v876
        %v878 = vpop.f32.mrf.mxu0
        %v879 = vadd.f32 %v498, %v878
        %880 = vmatprep.mubr.bf16.mxu0 %v741
        %881 = vmatmul.mubr.bf16.gmra.mxu0 %v556
        %v882 = vpop.f32.mrf.mxu0
        %v883 = vadd.f32 %v503, %v882
        %v884 = vpop.f32.mrf.mxu0
        %v885 = vadd.f32 %v503, %v884
        %v886 = vpop.f32.mrf.mxu0
        %v887 = vadd.f32 %v508, %v886
        %v888 = vpop.f32.mrf.mxu0
        %v889 = vadd.f32 %v508, %v888
        %890 = vmatprep.mubr.bf16.mxu0 %v744
        %891 = vmatmul.mubr.bf16.gmra.mxu0 %v558
        %v892 = vpop.f32.mrf.mxu0
        %v893 = vadd.f32 %v513, %v892
        %v894 = vpop.f32.mrf.mxu0
        %v895 = vadd.f32 %v513, %v894
        %v896 = vpop.f32.mrf.mxu0
        %v897 = vadd.f32 %v518, %v896
        %v898 = vpop.f32.mrf.mxu0
        %v899 = vadd.f32 %v518, %v898
        %900 = vmatprep.mubr.bf16.mxu0 %v747
        %901 = vmatmul.mubr.bf16.gmra.mxu0 %v560
        %v902 = vpop.f32.mrf.mxu0
        %v903 = vadd.f32 %v523, %v902
        %v904 = vpop.f32.mrf.mxu0
        %v905 = vadd.f32 %v523, %v904
        %v906 = vpop.f32.mrf.mxu0
        %v907 = vadd.f32 %v528, %v906
        %v908 = vpop.f32.mrf.mxu0
        %v909 = vadd.f32 %v528, %v908
        %910 = vdwg.mxu0
        %v911 = vmax.f32 %v800, 0.0
        %v912 = vmax.f32 %v802, 0.0
        %v913 = vmax.f32 %v873, 0.0
        %v914 = vmax.f32 %v875, 0.0
        %v915 = vmax.f32 %v804, 0.0
        %v916 = vmax.f32 %v806, 0.0
        %v917 = vmax.f32 %v877, 0.0
        %v918 = vmax.f32 %v879, 0.0
        %v919 = vmax.f32 %v810, 0.0
        %v920 = vmax.f32 %v812, 0.0
        %v921 = vmax.f32 %v883, 0.0
        %v922 = vmax.f32 %v885, 0.0
        %v923 = vmax.f32 %v814, 0.0
        %v924 = vmax.f32 %v816, 0.0
        %v925 = vmax.f32 %v887, 0.0
        %v926 = vmax.f32 %v889, 0.0
        %v927 = vmax.f32 %v820, 0.0
        %v928 = vmax.f32 %v822, 0.0
        %v929 = vmax.f32 %v893, 0.0
        %v930 = vmax.f32 %v895, 0.0
        %v931 = vmax.f32 %v824, 0.0
        %v932 = vmax.f32 %v826, 0.0
        %v933 = vmax.f32 %v897, 0.0
        %v934 = vmax.f32 %v899, 0.0
        %v935 = vmax.f32 %v830, 0.0
        %v936 = vmax.f32 %v832, 0.0
        %v937 = vmax.f32 %v903, 0.0
        %v938 = vmax.f32 %v905, 0.0
        %v939 = vmax.f32 %v834, 0.0
        %v940 = vmax.f32 %v836, 0.0
        %v941 = vmax.f32 %v907, 0.0
        %v942 = vmax.f32 %v909, 0.0
        %v943 = vld [vmem:[%s3] sm:$0xf]
        %v944 = vld [vmem:[%s3 + $0x4] sm:$0xf]
        %v945 = vld [vmem:[%s3 + $0x8] sm:$0xf]
        %v946 = vld [vmem:[%s3 + $0xc] sm:$0xf]
        %v947 = vpack.c.bf16 %v915, %v911
        %v948 = vpack.c.bf16 %v916, %v912
        %v949 = vpack.c.bf16 %v917, %v913
        %v950 = vpack.c.bf16 %v918, %v914
        %v951 = vpack.c.bf16 %v923, %v919
        %v952 = vpack.c.bf16 %v924, %v920
        %v953 = vpack.c.bf16 %v925, %v921
        %v954 = vpack.c.bf16 %v926, %v922
        %v955 = vpack.c.bf16 %v931, %v927
        %v956 = vpack.c.bf16 %v932, %v928
        %v957 = vpack.c.bf16 %v933, %v929
        %v958 = vpack.c.bf16 %v934, %v930
        %v959 = vpack.c.bf16 %v939, %v935
        %v960 = vpack.c.bf16 %v940, %v936
        %v961 = vpack.c.bf16 %v941, %v937
        %v962 = vpack.c.bf16 %v942, %v938
        %v963 = vld [vmem:[%s4] sm:$0xff]
        %v964 = vld [vmem:[%s4 + $0x8] sm:$0xff]
        %v965 = vld [vmem:[%s4 + $0x10] sm:$0xff]
        %v966 = vld [vmem:[%s4 + $0x18] sm:$0xff]
        %968 = vset.pattern.permute.xlu0 0
        %969 = vperm.xlu0 %968, %v963
        %v970 = vpop.permute.xlu0 %969
        %973 = vset.pattern.permute.xlu0 0
        %974 = vperm.xlu0 %973, %v964
        %v975 = vpop.permute.xlu0 %974
        %978 = vset.pattern.permute.xlu0 0
        %979 = vperm.xlu0 %978, %v965
        %v980 = vpop.permute.xlu0 %979
        %983 = vset.pattern.permute.xlu0 0
        %984 = vperm.xlu0 %983, %v966
        %v985 = vpop.permute.xlu0 %984
        %v991 = vunpack.c.l.b16 %v943
        %v992 = vunpack.c.l.b16 %v944
        %v993 = vunpack.c.l.b16 %v945
        %v994 = vunpack.c.l.b16 %v946
        %v995 = vpack.c.b16 %v992, %v991
        %v996 = vpack.c.b16 %v994, %v993
        %vm997 = vcmask 523264
        %v999 = vsel %vm997, %v995, 0
        %v1002 = vsel %vm997, %v996, 0
        %1004 = vmatprep.subr.bf16.mxu0 0
        %1005 = vmatpush1.bf16.msra.mxu0 0
        %1006 = vmatprep.subr.bf16.mxu0 0
        %1007 = vmatpush1.bf16.msra.mxu0 0
        %1008 = vmatprep.subr.bf16.mxu0 0
        %1009 = vmatpush1.bf16.msra.mxu0 0
        %1010 = vmatprep.subr.bf16.mxu0 0
        %1011 = vmatpush1.bf16.msra.mxu0 0
        %1012 = vmatprep.subr.bf16.mxu0 %v960
        %1013 = vmatpush1.bf16.msra.mxu0 %v959
        %1014 = vmatprep.subr.bf16.mxu0 %v956
        %1015 = vmatpush1.bf16.msra.mxu0 %v955
        %1016 = vmatprep.subr.bf16.mxu0 %v952
        %1017 = vmatpush1.bf16.msra.mxu0 %v951
        %1018 = vmatprep.subr.bf16.mxu0 %v948
        %1019 = vmatpush1.bf16.msra.mxu0 %v947
        %1020 = vmatprep.subr.bf16.mxu0 0
        %1021 = vmatpush2.bf16.msra.mxu0 0
        %1022 = vmatprep.subr.bf16.mxu0 0
        %1023 = vmatpush2.bf16.msra.mxu0 0
        %1024 = vmatprep.subr.bf16.mxu0 0
        %1025 = vmatpush2.bf16.msra.mxu0 0
        %1026 = vmatprep.subr.bf16.mxu0 0
        %1027 = vmatpush2.bf16.msra.mxu0 0
        %1028 = vmatprep.subr.bf16.mxu0 0
        %1029 = vmatpush2.bf16.msra.mxu0 0
        %1030 = vmatprep.subr.bf16.mxu0 0
        %1031 = vmatpush2.bf16.msra.mxu0 0
        %1032 = vmatprep.subr.bf16.mxu0 0
        %1033 = vmatpush2.bf16.msra.mxu0 0
        %1034 = vmatprep.subr.bf16.mxu0 0
        %1035 = vmatpush2.bf16.msra.mxu0 0
        %1036 = vmatprep.mubr.bf16.mxu0 0
        %1037 = vmatmul.mubr.bf16.gmra.mxu0 %v999
        %v1038 = vpop.f32.mrf.mxu0
        %v1039 = vadd.f32 %v970, %v1038
        %v1040 = vpop.f32.mrf.mxu0
        %v1041 = vadd.f32 %v970, %v1040
        %v1042 = vpop.f32.mrf.mxu0
        %v1043 = vadd.f32 %v975, %v1042
        %v1044 = vpop.f32.mrf.mxu0
        %v1045 = vadd.f32 %v975, %v1044
        %1046 = vmatprep.mubr.bf16.mxu0 0
        %1047 = vmatmul.mubr.bf16.gmra.mxu0 %v1002
        %v1048 = vpop.f32.mrf.mxu0
        %v1049 = vadd.f32 %v980, %v1048
        %v1050 = vpop.f32.mrf.mxu0
        %v1051 = vadd.f32 %v980, %v1050
        %v1052 = vpop.f32.mrf.mxu0
        %v1053 = vadd.f32 %v985, %v1052
        %v1054 = vpop.f32.mrf.mxu0
        %v1055 = vadd.f32 %v985, %v1054
        %1056 = vdwg.mxu0
        %1057 = vmatprep.subr.bf16.mxu0 0
        %1058 = vmatpush1.bf16.msra.mxu0 0
        %1059 = vmatprep.subr.bf16.mxu0 0
        %1060 = vmatpush1.bf16.msra.mxu0 0
        %1061 = vmatprep.subr.bf16.mxu0 0
        %1062 = vmatpush1.bf16.msra.mxu0 0
        %1063 = vmatprep.subr.bf16.mxu0 0
        %1064 = vmatpush1.bf16.msra.mxu0 0
        %1065 = vmatprep.subr.bf16.mxu0 %v962
        %1066 = vmatpush1.bf16.msra.mxu0 %v961
        %1067 = vmatprep.subr.bf16.mxu0 %v958
        %1068 = vmatpush1.bf16.msra.mxu0 %v957
        %1069 = vmatprep.subr.bf16.mxu0 %v954
        %1070 = vmatpush1.bf16.msra.mxu0 %v953
        %1071 = vmatprep.subr.bf16.mxu0 %v950
        %1072 = vmatpush1.bf16.msra.mxu0 %v949
        %1073 = vmatprep.subr.bf16.mxu0 0
        %1074 = vmatpush2.bf16.msra.mxu0 0
        %1075 = vmatprep.subr.bf16.mxu0 0
        %1076 = vmatpush2.bf16.msra.mxu0 0
        %1077 = vmatprep.subr.bf16.mxu0 0
        %1078 = vmatpush2.bf16.msra.mxu0 0
        %1079 = vmatprep.subr.bf16.mxu0 0
        %1080 = vmatpush2.bf16.msra.mxu0 0
        %1081 = vmatprep.subr.bf16.mxu0 0
        %1082 = vmatpush2.bf16.msra.mxu0 0
        %1083 = vmatprep.subr.bf16.mxu0 0
        %1084 = vmatpush2.bf16.msra.mxu0 0
        %1085 = vmatprep.subr.bf16.mxu0 0
        %1086 = vmatpush2.bf16.msra.mxu0 0
        %1087 = vmatprep.subr.bf16.mxu0 0
        %1088 = vmatpush2.bf16.msra.mxu0 0
        %1089 = vmatprep.mubr.bf16.mxu0 0
        %1090 = vmatmul.mubr.bf16.gmra.mxu0 %v999
        %v1091 = vpop.f32.mrf.mxu0
        %v1092 = vadd.f32 %v970, %v1091
        %v1093 = vpop.f32.mrf.mxu0
        %v1094 = vadd.f32 %v970, %v1093
        %v1095 = vpop.f32.mrf.mxu0
        %v1096 = vadd.f32 %v975, %v1095
        %v1097 = vpop.f32.mrf.mxu0
        %v1098 = vadd.f32 %v975, %v1097
        %1099 = vmatprep.mubr.bf16.mxu0 0
        %1100 = vmatmul.mubr.bf16.gmra.mxu0 %v1002
        %v1101 = vpop.f32.mrf.mxu0
        %v1102 = vadd.f32 %v980, %v1101
        %v1103 = vpop.f32.mrf.mxu0
        %v1104 = vadd.f32 %v980, %v1103
        %v1105 = vpop.f32.mrf.mxu0
        %v1106 = vadd.f32 %v985, %v1105
        %v1107 = vpop.f32.mrf.mxu0
        %v1108 = vadd.f32 %v985, %v1107
        %1109 = vdwg.mxu0
        %v1110 = vmax.f32 %v1039, 0.0
        %v1111 = vmax.f32 %v1041, 0.0
        %v1112 = vmax.f32 %v1092, 0.0
        %v1113 = vmax.f32 %v1094, 0.0
        %v1114 = vmax.f32 %v1043, 0.0
        %v1115 = vmax.f32 %v1045, 0.0
        %v1116 = vmax.f32 %v1096, 0.0
        %v1117 = vmax.f32 %v1098, 0.0
        %v1118 = vmax.f32 %v1049, 0.0
        %v1119 = vmax.f32 %v1051, 0.0
        %v1120 = vmax.f32 %v1102, 0.0
        %v1121 = vmax.f32 %v1104, 0.0
        %v1122 = vmax.f32 %v1053, 0.0
        %v1123 = vmax.f32 %v1055, 0.0
        %v1124 = vmax.f32 %v1106, 0.0
        %v1125 = vmax.f32 %v1108, 0.0
        %v1126 = vld [vmem:[%s5] sm:$0xf]
        %v1127 = vld [vmem:[%s5 + $0x4] sm:$0xf]
        %v1128 = vpack.c.bf16 %v1114, %v1110
        %v1129 = vpack.c.bf16 %v1115, %v1111
        %v1130 = vpack.c.bf16 %v1116, %v1112
        %v1131 = vpack.c.bf16 %v1117, %v1113
        %v1132 = vpack.c.bf16 %v1122, %v1118
        %v1133 = vpack.c.bf16 %v1123, %v1119
        %v1134 = vpack.c.bf16 %v1124, %v1120
        %v1135 = vpack.c.bf16 %v1125, %v1121
        %v1136 = vld [vmem:[%s6] sm:$0xff]
        %v1137 = vld [vmem:[%s6 + $0x8] sm:$0xff]
        %1139 = vset.pattern.permute.xlu0 0
        %1140 = vperm.xlu0 %1139, %v1136
        %v1141 = vpop.permute.xlu0 %1140
        %1144 = vset.pattern.permute.xlu0 0
        %1145 = vperm.xlu0 %1144, %v1137
        %v1146 = vpop.permute.xlu0 %1145
        %v1150 = vunpack.c.l.b16 %v1126
        %v1151 = vunpack.c.l.b16 %v1127
        %v1152 = vpack.c.b16 %v1151, %v1150
        %vm1153 = vcmask 261120
        %v1155 = vsel %vm1153, %v1152, 0
        %1157 = vmatprep.subr.bf16.mxu0 0
        %1158 = vmatpush1.bf16.msra.mxu0 0
        %1159 = vmatprep.subr.bf16.mxu0 0
        %1160 = vmatpush1.bf16.msra.mxu0 0
        %1161 = vmatprep.subr.bf16.mxu0 0
        %1162 = vmatpush1.bf16.msra.mxu0 0
        %1163 = vmatprep.subr.bf16.mxu0 0
        %1164 = vmatpush1.bf16.msra.mxu0 0
        %1165 = vmatprep.subr.bf16.mxu0 0
        %1166 = vmatpush1.bf16.msra.mxu0 0
        %1167 = vmatprep.subr.bf16.mxu0 0
        %1168 = vmatpush1.bf16.msra.mxu0 0
        %1169 = vmatprep.subr.bf16.mxu0 %v1133
        %1170 = vmatpush1.bf16.msra.mxu0 %v1132
        %1171 = vmatprep.subr.bf16.mxu0 %v1129
        %1172 = vmatpush1.bf16.msra.mxu0 %v1128
        %1173 = vmatprep.subr.bf16.mxu0 0
        %1174 = vmatpush2.bf16.msra.mxu0 0
        %1175 = vmatprep.subr.bf16.mxu0 0
        %1176 = vmatpush2.bf16.msra.mxu0 0
        %1177 = vmatprep.subr.bf16.mxu0 0
        %1178 = vmatpush2.bf16.msra.mxu0 0
        %1179 = vmatprep.subr.bf16.mxu0 0
        %1180 = vmatpush2.bf16.msra.mxu0 0
        %1181 = vmatprep.subr.bf16.mxu0 0
        %1182 = vmatpush2.bf16.msra.mxu0 0
        %1183 = vmatprep.subr.bf16.mxu0 0
        %1184 = vmatpush2.bf16.msra.mxu0 0
        %1185 = vmatprep.subr.bf16.mxu0 0
        %1186 = vmatpush2.bf16.msra.mxu0 0
        %1187 = vmatprep.subr.bf16.mxu0 0
        %1188 = vmatpush2.bf16.msra.mxu0 0
        %1189 = vmatprep.mubr.bf16.mxu0 0
        %1190 = vmatmul.mubr.bf16.gmra.mxu0 %v1155
        %v1191 = vpop.f32.mrf.mxu0
        %v1192 = vadd.f32 %v1141, %v1191
        %v1193 = vpop.f32.mrf.mxu0
        %v1194 = vadd.f32 %v1141, %v1193
        %v1195 = vpop.f32.mrf.mxu0
        %v1196 = vadd.f32 %v1146, %v1195
        %v1197 = vpop.f32.mrf.mxu0
        %v1198 = vadd.f32 %v1146, %v1197
        %1199 = vdwg.mxu0
        %1200 = vmatprep.subr.bf16.mxu0 0
        %1201 = vmatpush1.bf16.msra.mxu0 0
        %1202 = vmatprep.subr.bf16.mxu0 0
        %1203 = vmatpush1.bf16.msra.mxu0 0
        %1204 = vmatprep.subr.bf16.mxu0 0
        %1205 = vmatpush1.bf16.msra.mxu0 0
        %1206 = vmatprep.subr.bf16.mxu0 0
        %1207 = vmatpush1.bf16.msra.mxu0 0
        %1208 = vmatprep.subr.bf16.mxu0 0
        %1209 = vmatpush1.bf16.msra.mxu0 0
        %1210 = vmatprep.subr.bf16.mxu0 0
        %1211 = vmatpush1.bf16.msra.mxu0 0
        %1212 = vmatprep.subr.bf16.mxu0 %v1135
        %1213 = vmatpush1.bf16.msra.mxu0 %v1134
        %1214 = vmatprep.subr.bf16.mxu0 %v1131
        %1215 = vmatpush1.bf16.msra.mxu0 %v1130
        %1216 = vmatprep.subr.bf16.mxu0 0
        %1217 = vmatpush2.bf16.msra.mxu0 0
        %1218 = vmatprep.subr.bf16.mxu0 0
        %1219 = vmatpush2.bf16.msra.mxu0 0
        %1220 = vmatprep.subr.bf16.mxu0 0
        %1221 = vmatpush2.bf16.msra.mxu0 0
        %1222 = vmatprep.subr.bf16.mxu0 0
        %1223 = vmatpush2.bf16.msra.mxu0 0
        %1224 = vmatprep.subr.bf16.mxu0 0
        %1225 = vmatpush2.bf16.msra.mxu0 0
        %1226 = vmatprep.subr.bf16.mxu0 0
        %1227 = vmatpush2.bf16.msra.mxu0 0
        %1228 = vmatprep.subr.bf16.mxu0 0
        %1229 = vmatpush2.bf16.msra.mxu0 0
        %1230 = vmatprep.subr.bf16.mxu0 0
        %1231 = vmatpush2.bf16.msra.mxu0 0
        %1232 = vmatprep.mubr.bf16.mxu0 0
        %1233 = vmatmul.mubr.bf16.gmra.mxu0 %v1155
        %v1234 = vpop.f32.mrf.mxu0
        %v1235 = vadd.f32 %v1141, %v1234
        %v1236 = vpop.f32.mrf.mxu0
        %v1237 = vadd.f32 %v1141, %v1236
        %v1238 = vpop.f32.mrf.mxu0
        %v1239 = vadd.f32 %v1146, %v1238
        %v1240 = vpop.f32.mrf.mxu0
        %v1241 = vadd.f32 %v1146, %v1240
        %1242 = vdwg.mxu0
        %v1243 = vmax.f32 %v1192, 0.0
        %v1244 = vmax.f32 %v1194, 0.0
        %v1245 = vmax.f32 %v1235, 0.0
        %v1246 = vmax.f32 %v1237, 0.0
        %v1247 = vmax.f32 %v1196, 0.0
        %v1248 = vmax.f32 %v1198, 0.0
        %v1249 = vmax.f32 %v1239, 0.0
        %v1250 = vmax.f32 %v1241, 0.0
        %v1251 = vld [vmem:[%s7] sm:$0xff]
        %v1252 = vld [vmem:[%s7 + $0x8] sm:$0xff]
        %1254 = vset.pattern.permute.xlu0 0
        %1255 = vperm.xlu0 %1254, %v1251
        %v1256 = vpop.permute.xlu0 %1255
        %1259 = vset.pattern.permute.xlu0 0
        %1260 = vperm.xlu0 %1259, %v1252
        %v1261 = vpop.permute.xlu0 %1260
        %v1263 = vmul.f32 %v1243, %v1256
        %v1264 = vmul.f32 %v1244, %v1256
        %v1265 = vmul.f32 %v1245, %v1256
        %v1266 = vmul.f32 %v1246, %v1256
        %v1267 = vmul.f32 %v1247, %v1261
        %v1268 = vmul.f32 %v1248, %v1261
        %v1269 = vmul.f32 %v1249, %v1261
        %v1270 = vmul.f32 %v1250, %v1261
        %v1271 = vadd.f32 %v1263, %v1267
        %v1272 = vrot.slane %v1271, 4
        %v1273 = vadd.f32 %v1271, %v1272
        %v1274 = vrot.slane %v1273, 2
        %v1275 = vadd.f32 %v1273, %v1274
        %v1276 = vrot.slane %v1275, 1
        %v1277 = vadd.f32 %v1275, %v1276
        %v1278 = vadd.f32 %v1264, %v1268
        %v1279 = vrot.slane %v1278, 4
        %v1280 = vadd.f32 %v1278, %v1279
        %v1281 = vrot.slane %v1280, 2
        %v1282 = vadd.f32 %v1280, %v1281
        %v1283 = vrot.slane %v1282, 1
        %v1284 = vadd.f32 %v1282, %v1283
        %v1285 = vadd.f32 %v1265, %v1269
        %v1286 = vrot.slane %v1285, 4
        %v1287 = vadd.f32 %v1285, %v1286
        %v1288 = vrot.slane %v1287, 2
        %v1289 = vadd.f32 %v1287, %v1288
        %v1290 = vrot.slane %v1289, 1
        %v1291 = vadd.f32 %v1289, %v1290
        %v1292 = vadd.f32 %v1266, %v1270
        %v1293 = vrot.slane %v1292, 4
        %v1294 = vadd.f32 %v1292, %v1293
        %v1295 = vrot.slane %v1294, 2
        %v1296 = vadd.f32 %v1294, %v1295
        %v1297 = vrot.slane %v1296, 1
        %v1298 = vadd.f32 %v1296, %v1297
        %v1299 = vld [vmem:[#allocation2] sm:$0x1]
        %1301 = vset.pattern.permute.xlu0 0
        %1302 = vperm.xlu0 %1301, %v1299
        %v1303 = vpop.permute.xlu0 %1302
        %v1305 = vlaneseq
        %v1306 = vshrl.u32 %v1305, 7
        %v1307 = vsub.s32 0, %v1306
        %v1308 = vrot.slane %v1303, %v1307
        %v1309 = vadd.f32 %v1277, %v1308
        %v1310 = vadd.f32 %v1284, %v1308
        %v1311 = vadd.f32 %v1291, %v1308
        %v1312 = vadd.f32 %v1298, %v1308
        %v1313 = vmax.f32 %v1309, 0.0
        %v1314 = vmax.f32 %v1310, 0.0
        %v1315 = vmax.f32 %v1311, 0.0
        %v1316 = vmax.f32 %v1312, 0.0
        %v1321 = vcombine.low %v1313, %v1314
        %v1322 = vcombine.low %v1315, %v1316
        %v1324 = vunpack.c.l.s4 1966171168
        %v1325 = vunpack.c.0.s8 %v1324
        %v1326 = vlaneseq
        %v1327 = vshrl.u32 %v1326, 7
        %v1328 = vsub.s32 %v1325, %v1327
        %v1329 = vrot.slane %v1321, %v1328
        %v1331 = vunpack.c.l.s4 1966171168
        %v1332 = vunpack.c.0.s8 %v1331
        %v1333 = vlaneseq
        %v1334 = vshrl.u32 %v1333, 7
        %v1335 = vsub.s32 %v1332, %v1334
        %v1336 = vrot.slane %v1322, %v1335
        %v1337 = vcombine.low %v1329, %v1336
        %v1339 = vunpack.c.l.s4 1966171168
        %v1340 = vunpack.c.0.s8 %v1339
        %v1341 = vlaneseq
        %v1342 = vshrl.u32 %v1341, 7
        %v1343 = vsub.s32 %v1340, %v1342
        %v1344 = vrot.slane %v1337, %v1343
        %v1346 = vlaneseq
        %vm1347 = vcmp.ge.s32.totalorder %v1346, 0
        %vm1348 = vcmp.lt.s32.totalorder %v1346, 512
        %vm1349 = vmand %vm1347, %vm1348
        %1350 = vst.msk [vmem:[%s436] sm:$0xf] %vm1349, %v1344
        %s1351 = sand.u32 %s243, 1
        %s1352 = scalar_lea.sflag [#allocation5], %s1351
        %s1353 = sand.u32 %s243, 1
        %s1354 = smul.addr %s1353, 4
        %s1355 = scalar_lea.vmem [#allocation4], %s1354
        // Predicated region
        $region80: #{tpu_custom_call.1} parent=74 // pred_check
          %p1356 = pneg %p253
        $region81: #{tpu_custom_call.1} parent=74 // pred_check_branch
          %1358 = sbr.rel (%p1356) target = $region83
        $region82: #{tpu_custom_call.1} parent=74 // pred_region
          %s1359 = smul.u32 4, %s30
          %s1361 = ssub.s32 64, 64
          %1362 = vsyncadd %s1352, %s1361
          %s1363 = smul.addr %s29, 16
          %s1364 = sadd.s32 %s1359, %s1363
          %s1365 = smul.addr %s1364, 16
          %s1366 = scalar_lea.hbm %s9, %s1365
          %s1368 = sshll.u32 %s1355, 4
          %s1369 = int_to_ptr.vmem [resolvable:$true] %s1368
          %1371 = dma.vmem_to_hbm [thread:$0]  %s1369, 64, %s1366, %s1352
        $region83: #{tpu_custom_call.1} parent=74 // pred_fallthru
          _
      $region75: #{tpu_custom_call.1} parent=5 // pred_fallthru
        _
      %p1372 = scmp.le.s32.totalorder 2, %s20
      // Predicated region
      $region84: #{tpu_custom_call.1} parent=5 // pred_check
        %p1373 = pneg %p1372
      $region85: #{tpu_custom_call.1} parent=5 // pred_check_branch
        %1375 = sbr.rel (%p1373) target = $region87
      $region86: #{tpu_custom_call.1} parent=5 // pred_region
        %s1376 = ssub.s32 %s20, 2
        // Predicated region
        $region88: #{tpu_custom_call.1} parent=86 // pred_check
          %p1377 = pneg %p259
        $region89: #{tpu_custom_call.1} parent=86 // pred_check_branch
          %1379 = sbr.rel (%p1377) target = $region91
        $region90: #{tpu_custom_call.1} parent=86 // pred_region
          %s1380 = sand.u32 %s244, 1
          %s1381 = scalar_lea.sflag [#allocation5], %s1380
          %s1382 = sand.u32 %s244, 1
          %s1383 = smul.addr %s1382, 4
          %s1384 = scalar_lea.vmem [#allocation4], %s1383
          %1385 = dma.done %s1381, 64
        $region91: #{tpu_custom_call.1} parent=86 // pred_fallthru
          _
      $region87: #{tpu_custom_call.1} parent=5 // pred_fallthru
        _
    $region6: #{tpu_custom_call.1} parent=1 // loop_footer
      %s24 = sadd.s32 1, %s20
    $region7: #{tpu_custom_call.1} parent=1 // loop_footer_branch
      %19 = sbr.rel target = $region3
    $region8: #{tpu_custom_call.1} parent=1 // loop_exit
      _
    %1386 = vsyncpa [#allocation5], 1
    %s1387 = scalar_lea.sflag [#allocation5], 1
    %1388 = vsyncpa %s1387, 1

</llo_original>
